<compile_context>
chip_gen: v7x
topology: tpu7x:2x2x1
jax: 0.10.0
libtpu: 0.0.40
codegen_flags: <defaults>
</compile_context>

<pallas_src>
import jax
import jax.numpy as jnp
from jax.experimental import pallas as pl
from jax.experimental.pallas import tpu as pltpu


# ----------------------------- configuration --------------------------------
B = 2            # batch
C_IN = 16        # input_channels
C_OUT = 16       # out_channels
C_EXP = 32       # expanded_channels
KSIZE = 3        # kernel_size
STRIDE = 1       # stride (residual requires it)
DILATION = 1     # dilation
L = 32           # sequence length


def _make_divisible(v, divisor=8):
    new_v = max(divisor, int(v + divisor / 2) // divisor * divisor)
    if new_v < 0.9 * v:
        new_v += divisor
    return new_v


C_SQ = _make_divisible(C_EXP // 4, 8)            # squeeze channels
USE_RES = (STRIDE == 1 and C_IN == C_OUT)        # residual connection
PAD = DILATION * (KSIZE - 1) // 2                # 'same' padding
WPAD = C_EXP                                     # >= C_IN, C_OUT, C_SQ (weight slab pad)


# ------------------------------- the kernel ---------------------------------
def inverted_residual_se_kernel(
    x_ref,     # (B, C_in, L)        activations, NCL
    w_ref,     # (4, WPAD, WPAD)     packed matmul weights (zero padded)
    cv_ref,    # (C_EXP, 8)          sublane-oriented channel vectors
    lv_ref,    # (2, C_EXP)          lane-oriented SE biases
    o_ref,     # (B, C_out, L)
):
    f32 = jnp.float32
    x = x_ref[...]                                              # (B, C_in, L)

    # --- unpack parameters (static slices, zero-cost) ---
    w1 = w_ref[0][:C_EXP, :C_IN]                                # (C_exp, C_in)
    wpw = w_ref[1][:C_OUT, :C_EXP]                              # (C_out, C_exp)
    wfc1 = w_ref[2][:C_EXP, :C_SQ]                              # (C_exp, C_sq)
    wfc2 = w_ref[3][:C_SQ, :C_EXP]                              # (C_sq, C_exp)

    cv = cv_ref[...]                                            # (C_exp, 8)
    b1 = cv[:, 0:1][None, :, :]                                 # (1, C_exp, 1)
    bdw = cv[:, 1:2][None, :, :]                                # (1, C_exp, 1)
    bpw = cv[:C_OUT, 2:3][None, :, :]                           # (1, C_out, 1)

    lv = lv_ref[...]                                            # (2, C_exp)
    bfc1 = lv[0:1, :C_SQ]                                       # (1, C_sq)
    bfc2 = lv[1:2, :]                                           # (1, C_exp)

    # 1) 1x1 expansion conv + bias + ReLU (batched MXU matmul, L on lanes)
    w1b = jnp.broadcast_to(w1, (B, C_EXP, C_IN))
    h = jnp.einsum('bec,bcl->bel', w1b, x, preferred_element_type=f32)
    h = jnp.maximum(h + b1, 0.0)                                # (B, C_exp, L)

    # 2) depthwise conv along L: static lane rolls (XLU) + edge masks folded
    #    into the tap weight -> one FMA per tap on the (B, C_exp, L) tensor.
    lane = jax.lax.broadcasted_iota(jnp.int32, (1, 1, L), 2)
    acc = None
    for k in range(KSIZE):                                      # static tap loop
        shift = PAD - k * DILATION                              # source index = l - shift
        wk = cv[:, 3 + k:4 + k][None, :, :]                     # (1, C_exp, 1)
        if shift == 0:
            term = h * wk
        else:
            hk = pltpu.roll(h, shift=shift % L, axis=2)
            src = lane - shift
            mask = ((src >= 0) & (src < L)).astype(f32)         # 'same' zero pad
            term = hk * (wk * mask)
        acc = term if acc is None else acc + term
    dw = jnp.maximum(acc + bdw, 0.0)                            # (B, C_exp, L)

    # 3) squeeze-and-excitation (pool over L, two tiny matmuls, Hardsigmoid)
    s = jnp.sum(dw, axis=2) * (1.0 / L)                         # (B, C_exp)
    z = jnp.maximum(jnp.dot(s, wfc1, preferred_element_type=f32) + bfc1, 0.0)
    g = jnp.dot(z, wfc2, preferred_element_type=f32) + bfc2     # (B, C_exp)
    g = jnp.clip(g * (1.0 / 6.0) + 0.5, 0.0, 1.0)               # Hardsigmoid
    dw = dw * g[:, :, None]                                     # scale, bcast over L

    # 4) 1x1 projection conv + bias (no activation)
    wpwb = jnp.broadcast_to(wpw, (B, C_OUT, C_EXP))
    out = jnp.einsum('boe,bel->bol', wpwb, dw, preferred_element_type=f32)
    out = out + bpw                                             # (B, C_out, L)

    # 5) residual connection
    if USE_RES:
        out = out + x

    o_ref[...] = out.astype(o_ref.dtype)


# ------------------------------- the wrapper ---------------------------------
def pack_params(w1, b1, wdw, bdw, wfc1, bfc1, wfc2, bfc2, wpw, bpw):
    """Pack the 10 parameter arrays into 3 slabs (done ONCE, outside jit)."""
    w_slab = jnp.zeros((4, WPAD, WPAD), jnp.float32)
    w_slab = w_slab.at[0, :C_EXP, :C_IN].set(w1)
    w_slab = w_slab.at[1, :C_OUT, :C_EXP].set(wpw)
    w_slab = w_slab.at[2, :C_EXP, :C_SQ].set(wfc1)
    w_slab = w_slab.at[3, :C_SQ, :C_EXP].set(wfc2)

    cv_slab = jnp.zeros((C_EXP, 8), jnp.float32)                # channel vectors, (C,1)-oriented
    cv_slab = cv_slab.at[:, 0].set(b1)
    cv_slab = cv_slab.at[:, 1].set(bdw)
    cv_slab = cv_slab.at[:C_OUT, 2].set(bpw)
    cv_slab = cv_slab.at[:, 3:3 + KSIZE].set(wdw.T)             # depthwise taps as columns

    lv_slab = jnp.zeros((2, C_EXP), jnp.float32)                # SE biases, (1,C)-oriented
    lv_slab = lv_slab.at[0, :C_SQ].set(bfc1)
    lv_slab = lv_slab.at[1, :].set(bfc2)
    return w_slab, cv_slab, lv_slab


@jax.jit
def inverted_residual_se(x_ncl, w_slab, cv_slab, lv_slab):
    """x_ncl: (B, C_in, L) float32 (PyTorch NCL). Returns (B, C_out, L)."""
    # Gridless: the whole problem fits VMEM; 4 inputs -> 4 DMAs, no wrapper
    # transposes/reshapes, no pipeline prologue/epilogue.
    return pl.pallas_call(
        inverted_residual_se_kernel,
        out_shape=jax.ShapeDtypeStruct((B, C_OUT, L), jnp.float32),
        in_specs=[pl.BlockSpec(memory_space=pltpu.MemorySpace.VMEM)
                  for _ in range(4)],
        out_specs=pl.BlockSpec(memory_space=pltpu.MemorySpace.VMEM),
    )(x_ncl, w_slab, cv_slab, lv_slab)


# ------------------------ pure-JAX reference (check) -------------------------
def reference_forward(x_ncl, params):
    (w1, b1, wdw, bdw, wfc1, bfc1, wfc2, bfc2, wpw, bpw) = params
    x = jnp.transpose(x_ncl, (0, 2, 1))                          # (B, L, C_in)
    h = jax.nn.relu(jnp.einsum('blc,ec->ble', x, w1) + b1)
    hp = jnp.pad(h, ((0, 0), (PAD, PAD), (0, 0)))
    dw = sum(hp[:, k * DILATION:k * DILATION + L, :] * wdw[k] for k in range(KSIZE))
    dw = jax.nn.relu(dw + bdw)
    pool = dw.mean(axis=1, keepdims=True)                        # (B, 1, C_exp)
    z = jax.nn.relu(jnp.einsum('ble,es->bls', pool, wfc1) + bfc1)
    g = jax.nn.hard_sigmoid(jnp.einsum('bls,se->ble', z, wfc2) + bfc2)
    out = jnp.einsum('ble,oe->blo', dw * g, wpw) + bpw
    if USE_RES:
        out = out + x
    return jnp.transpose(out, (0, 2, 1))


# ----------------------------------- main ------------------------------------
if __name__ == "__main__":
    key = jax.random.PRNGKey(0)
    keys = jax.random.split(key, 11)

    x = jax.random.normal(keys[0], (B, C_IN, L), dtype=jnp.float32)

    # Deterministic synthetic parameters (shapes follow the PyTorch module).
    w1 = 0.2 * jax.random.normal(keys[1], (C_EXP, C_IN), jnp.float32)    # expansion 1x1
    b1 = 0.1 * jax.random.normal(keys[2], (C_EXP,), jnp.float32)
    wdw = 0.2 * jax.random.normal(keys[3], (KSIZE, C_EXP), jnp.float32)  # depthwise taps
    bdw = 0.1 * jax.random.normal(keys[4], (C_EXP,), jnp.float32)
    wfc1 = 0.2 * jax.random.normal(keys[5], (C_EXP, C_SQ), jnp.float32)  # SE fc1
    bfc1 = 0.1 * jax.random.normal(keys[6], (C_SQ,), jnp.float32)
    wfc2 = 0.2 * jax.random.normal(keys[7], (C_SQ, C_EXP), jnp.float32)  # SE fc2
    bfc2 = 0.1 * jax.random.normal(keys[8], (C_EXP,), jnp.float32)
    wpw = 0.2 * jax.random.normal(keys[9], (C_OUT, C_EXP), jnp.float32)  # projection 1x1
    bpw = 0.1 * jax.random.normal(keys[10], (C_OUT,), jnp.float32)

    params = (w1, b1, wdw, bdw, wfc1, bfc1, wfc2, bfc2, wpw, bpw)
    w_slab, cv_slab, lv_slab = pack_params(*params)

    out = jax.block_until_ready(inverted_residual_se(x, w_slab, cv_slab, lv_slab))
    ref = jax.block_until_ready(reference_forward(x, params))

    assert out.shape == (B, C_OUT, L)
    assert jnp.allclose(out, ref, atol=1e-5, rtol=1e-5), "mismatch vs JAX reference"

    print("KERNEL_OK")
</pallas_src>

<mosaic_0001>
module attributes {stable_mosaic.version = 11 : i64} {
  func.func @inverted_residual_se_kernel(%arg0: memref<2x16x32xf32, #tpu.memory_space<vmem>>, %arg1: memref<4x32x32xf32, #tpu.memory_space<vmem>>, %arg2: memref<32x8xf32, #tpu.memory_space<vmem>>, %arg3: memref<2x32xf32, #tpu.memory_space<vmem>>, %arg4: memref<2x16x32xf32, #tpu.memory_space<vmem>>) attributes {dimension_semantics = [], scalar_prefetch = 0 : i64, scratch_operands = 0 : i64, tpu.core_type = #tpu.core_type<tc>} {
    %c0 = arith.constant 0 : index
    %c0_0 = arith.constant 0 : index
    %c0_1 = arith.constant 0 : index
    %0 = vector.load %arg0[%c0, %c0_0, %c0_1] : memref<2x16x32xf32, #tpu.memory_space<vmem>>, vector<2x16x32xf32>
    %c0_2 = arith.constant 0 : index
    %c0_3 = arith.constant 0 : index
    %c0_4 = arith.constant 0 : index
    %1 = vector.load %arg1[%c0_2, %c0_3, %c0_4] : memref<4x32x32xf32, #tpu.memory_space<vmem>>, vector<1x32x32xf32>
    %2 = vector.shape_cast %1 : vector<1x32x32xf32> to vector<32x32xf32>
    %3 = vector.extract_strided_slice %2 {offsets = [0, 0], sizes = [32, 16], strides = [1, 1]} : vector<32x32xf32> to vector<32x16xf32>
    %c1 = arith.constant 1 : index
    %c0_5 = arith.constant 0 : index
    %c0_6 = arith.constant 0 : index
    %4 = vector.load %arg1[%c1, %c0_5, %c0_6] : memref<4x32x32xf32, #tpu.memory_space<vmem>>, vector<1x32x32xf32>
    %5 = vector.shape_cast %4 : vector<1x32x32xf32> to vector<32x32xf32>
    %6 = vector.extract_strided_slice %5 {offsets = [0, 0], sizes = [16, 32], strides = [1, 1]} : vector<32x32xf32> to vector<16x32xf32>
    %c2 = arith.constant 2 : index
    %c0_7 = arith.constant 0 : index
    %c0_8 = arith.constant 0 : index
    %7 = vector.load %arg1[%c2, %c0_7, %c0_8] : memref<4x32x32xf32, #tpu.memory_space<vmem>>, vector<1x32x32xf32>
    %8 = vector.shape_cast %7 : vector<1x32x32xf32> to vector<32x32xf32>
    %9 = vector.extract_strided_slice %8 {offsets = [0, 0], sizes = [32, 8], strides = [1, 1]} : vector<32x32xf32> to vector<32x8xf32>
    %c3 = arith.constant 3 : index
    %c0_9 = arith.constant 0 : index
    %c0_10 = arith.constant 0 : index
    %10 = vector.load %arg1[%c3, %c0_9, %c0_10] : memref<4x32x32xf32, #tpu.memory_space<vmem>>, vector<1x32x32xf32>
    %11 = vector.shape_cast %10 : vector<1x32x32xf32> to vector<32x32xf32>
    %12 = vector.extract_strided_slice %11 {offsets = [0, 0], sizes = [8, 32], strides = [1, 1]} : vector<32x32xf32> to vector<8x32xf32>
    %c0_11 = arith.constant 0 : index
    %c0_12 = arith.constant 0 : index
    %13 = vector.load %arg2[%c0_11, %c0_12] : memref<32x8xf32, #tpu.memory_space<vmem>>, vector<32x8xf32>
    %14 = vector.extract_strided_slice %13 {offsets = [0, 0], sizes = [32, 1], strides = [1, 1]} : vector<32x8xf32> to vector<32x1xf32>
    %15 = vector.shape_cast %14 : vector<32x1xf32> to vector<1x32x1xf32>
    %16 = vector.extract_strided_slice %13 {offsets = [0, 1], sizes = [32, 1], strides = [1, 1]} : vector<32x8xf32> to vector<32x1xf32>
    %17 = vector.shape_cast %16 : vector<32x1xf32> to vector<1x32x1xf32>
    %18 = vector.extract_strided_slice %13 {offsets = [0, 2], sizes = [16, 1], strides = [1, 1]} : vector<32x8xf32> to vector<16x1xf32>
    %19 = vector.shape_cast %18 : vector<16x1xf32> to vector<1x16x1xf32>
    %c0_13 = arith.constant 0 : index
    %c0_14 = arith.constant 0 : index
    %20 = vector.load %arg3[%c0_13, %c0_14] : memref<2x32xf32, #tpu.memory_space<vmem>>, vector<2x32xf32>
    %21 = vector.extract_strided_slice %20 {offsets = [0, 0], sizes = [1, 8], strides = [1, 1]} : vector<2x32xf32> to vector<1x8xf32>
    %22 = vector.extract_strided_slice %20 {offsets = [1, 0], sizes = [1, 32], strides = [1, 1]} : vector<2x32xf32> to vector<1x32xf32>
    %23 = vector.shape_cast %3 : vector<32x16xf32> to vector<1x32x16xf32>
    %24 = vector.broadcast %23 : vector<1x32x16xf32> to vector<2x32x16xf32>
    "tpu.trace_start"() <{level = 10 : i32, message = "bec,bcl->bel"}> : () -> ()
    %cst = arith.constant dense<0.000000e+00> : vector<2x32x32xf32>
    %25 = tpu.matmul %24, %0, %cst {dimension_numbers = #tpu.dot_dimension_numbers<[2], [1], [1], [2], [0, 0, 0, 1, 1, 2], [0], [0]>} : vector<2x32x16xf32>, vector<2x16x32xf32>, vector<2x32x32xf32> -> vector<2x32x32xf32>
    "tpu.trace_stop"() : () -> ()
    %26 = vector.broadcast %15 : vector<1x32x1xf32> to vector<2x32x32xf32>
    %27 = arith.addf %25, %26 : vector<2x32x32xf32>
    %cst_15 = arith.constant 0.000000e+00 : f32
    %28 = vector.broadcast %cst_15 : f32 to vector<2x32x32xf32>
    %29 = arith.maximumf %27, %28 : vector<2x32x32xf32>
    %30 = tpu.iota {dimensions = array<i32: 2>} : vector<1x1x32xi32>
    %31 = vector.extract_strided_slice %13 {offsets = [0, 3], sizes = [32, 1], strides = [1, 1]} : vector<32x8xf32> to vector<32x1xf32>
    %32 = vector.shape_cast %31 : vector<32x1xf32> to vector<1x32x1xf32>
    %c1_i32 = arith.constant 1 : i32
    %33 = tpu.dynamic_rotate %29 by %c1_i32 dim 2 : vector<2x32x32xf32>, i32 -> vector<2x32x32xf32>
    %c1_i32_16 = arith.constant 1 : i32
    %34 = vector.broadcast %c1_i32_16 : i32 to vector<1x1x32xi32>
    %35 = arith.subi %30, %34 : vector<1x1x32xi32>
    %c0_i32 = arith.constant 0 : i32
    %36 = vector.broadcast %c0_i32 : i32 to vector<1x1x32xi32>
    %37 = arith.cmpi sge, %35, %36 : vector<1x1x32xi32>
    %c32_i32 = arith.constant 32 : i32
    %38 = vector.broadcast %c32_i32 : i32 to vector<1x1x32xi32>
    %39 = arith.cmpi slt, %35, %38 : vector<1x1x32xi32>
    %40 = arith.andi %37, %39 : vector<1x1x32xi1>
    %41 = arith.extui %40 : vector<1x1x32xi1> to vector<1x1x32xi32>
    %42 = arith.sitofp %41 : vector<1x1x32xi32> to vector<1x1x32xf32>
    %43 = vector.broadcast %32 : vector<1x32x1xf32> to vector<1x32x32xf32>
    %44 = vector.broadcast %42 : vector<1x1x32xf32> to vector<1x32x32xf32>
    %45 = arith.mulf %43, %44 : vector<1x32x32xf32>
    %46 = vector.broadcast %45 : vector<1x32x32xf32> to vector<2x32x32xf32>
    %47 = arith.mulf %33, %46 : vector<2x32x32xf32>
    %48 = vector.extract_strided_slice %13 {offsets = [0, 4], sizes = [32, 1], strides = [1, 1]} : vector<32x8xf32> to vector<32x1xf32>
    %49 = vector.shape_cast %48 : vector<32x1xf32> to vector<1x32x1xf32>
    %50 = vector.broadcast %49 : vector<1x32x1xf32> to vector<2x32x32xf32>
    %51 = arith.mulf %29, %50 : vector<2x32x32xf32>
    %52 = arith.addf %47, %51 : vector<2x32x32xf32>
    %53 = vector.extract_strided_slice %13 {offsets = [0, 5], sizes = [32, 1], strides = [1, 1]} : vector<32x8xf32> to vector<32x1xf32>
    %54 = vector.shape_cast %53 : vector<32x1xf32> to vector<1x32x1xf32>
    %c31_i32 = arith.constant 31 : i32
    %55 = tpu.dynamic_rotate %29 by %c31_i32 dim 2 : vector<2x32x32xf32>, i32 -> vector<2x32x32xf32>
    %c-1_i32 = arith.constant -1 : i32
    %56 = vector.broadcast %c-1_i32 : i32 to vector<1x1x32xi32>
    %57 = arith.subi %30, %56 : vector<1x1x32xi32>
    %c0_i32_17 = arith.constant 0 : i32
    %58 = vector.broadcast %c0_i32_17 : i32 to vector<1x1x32xi32>
    %59 = arith.cmpi sge, %57, %58 : vector<1x1x32xi32>
    %c32_i32_18 = arith.constant 32 : i32
    %60 = vector.broadcast %c32_i32_18 : i32 to vector<1x1x32xi32>
    %61 = arith.cmpi slt, %57, %60 : vector<1x1x32xi32>
    %62 = arith.andi %59, %61 : vector<1x1x32xi1>
    %63 = arith.extui %62 : vector<1x1x32xi1> to vector<1x1x32xi32>
    %64 = arith.sitofp %63 : vector<1x1x32xi32> to vector<1x1x32xf32>
    %65 = vector.broadcast %54 : vector<1x32x1xf32> to vector<1x32x32xf32>
    %66 = vector.broadcast %64 : vector<1x1x32xf32> to vector<1x32x32xf32>
    %67 = arith.mulf %65, %66 : vector<1x32x32xf32>
    %68 = vector.broadcast %67 : vector<1x32x32xf32> to vector<2x32x32xf32>
    %69 = arith.mulf %55, %68 : vector<2x32x32xf32>
    %70 = arith.addf %52, %69 : vector<2x32x32xf32>
    %71 = vector.broadcast %17 : vector<1x32x1xf32> to vector<2x32x32xf32>
    %72 = arith.addf %70, %71 : vector<2x32x32xf32>
    %cst_19 = arith.constant 0.000000e+00 : f32
    %73 = vector.broadcast %cst_19 : f32 to vector<2x32x32xf32>
    %74 = arith.maximumf %72, %73 : vector<2x32x32xf32>
    %cst_20 = arith.constant dense<0.000000e+00> : vector<2x32xf32>
    %75 = vector.multi_reduction <add>, %74, %cst_20 [2] : vector<2x32x32xf32> to vector<2x32xf32>
    %cst_21 = arith.constant 3.125000e-02 : f32
    %76 = vector.broadcast %cst_21 : f32 to vector<2x32xf32>
    %77 = arith.mulf %75, %76 : vector<2x32xf32>
    %cst_22 = arith.constant dense<0.000000e+00> : vector<2x8xf32>
    %78 = tpu.matmul %77, %9, %cst_22 {dimension_numbers = #tpu.dot_dimension_numbers<[1], [0], [0], [1], [0, 0, 1, 1], [], []>} : vector<2x32xf32>, vector<32x8xf32>, vector<2x8xf32> -> vector<2x8xf32>
    %79 = vector.broadcast %21 : vector<1x8xf32> to vector<2x8xf32>
    %80 = arith.addf %78, %79 : vector<2x8xf32>
    %cst_23 = arith.constant 0.000000e+00 : f32
    %81 = vector.broadcast %cst_23 : f32 to vector<2x8xf32>
    %82 = arith.maximumf %80, %81 : vector<2x8xf32>
    %cst_24 = arith.constant dense<0.000000e+00> : vector<2x32xf32>
    %83 = tpu.matmul %82, %12, %cst_24 {dimension_numbers = #tpu.dot_dimension_numbers<[1], [0], [0], [1], [0, 0, 1, 1], [], []>} : vector<2x8xf32>, vector<8x32xf32>, vector<2x32xf32> -> vector<2x32xf32>
    %84 = vector.broadcast %22 : vector<1x32xf32> to vector<2x32xf32>
    %85 = arith.addf %83, %84 : vector<2x32xf32>
    %cst_25 = arith.constant 0.166666672 : f32
    %86 = vector.broadcast %cst_25 : f32 to vector<2x32xf32>
    %87 = arith.mulf %85, %86 : vector<2x32xf32>
    %cst_26 = arith.constant 5.000000e-01 : f32
    %88 = vector.broadcast %cst_26 : f32 to vector<2x32xf32>
    %89 = arith.addf %87, %88 : vector<2x32xf32>
    %cst_27 = arith.constant 0.000000e+00 : f32
    %cst_28 = arith.constant 1.000000e+00 : f32
    %90 = vector.broadcast %cst_27 : f32 to vector<2x32xf32>
    %91 = arith.maximumf %90, %89 : vector<2x32xf32>
    %92 = vector.broadcast %cst_28 : f32 to vector<2x32xf32>
    %93 = arith.minimumf %92, %91 : vector<2x32xf32>
    %94 = vector.shape_cast %93 : vector<2x32xf32> to vector<2x32x1xf32>
    %95 = vector.broadcast %94 : vector<2x32x1xf32> to vector<2x32x32xf32>
    %96 = arith.mulf %74, %95 : vector<2x32x32xf32>
    %97 = vector.shape_cast %6 : vector<16x32xf32> to vector<1x16x32xf32>
    %98 = vector.broadcast %97 : vector<1x16x32xf32> to vector<2x16x32xf32>
    "tpu.trace_start"() <{level = 10 : i32, message = "boe,bel->bol"}> : () -> ()
    %cst_29 = arith.constant dense<0.000000e+00> : vector<2x16x32xf32>
    %99 = tpu.matmul %98, %96, %cst_29 {dimension_numbers = #tpu.dot_dimension_numbers<[2], [1], [1], [2], [0, 0, 0, 1, 1, 2], [0], [0]>} : vector<2x16x32xf32>, vector<2x32x32xf32>, vector<2x16x32xf32> -> vector<2x16x32xf32>
    "tpu.trace_stop"() : () -> ()
    %100 = vector.broadcast %19 : vector<1x16x1xf32> to vector<2x16x32xf32>
    %101 = arith.addf %99, %100 : vector<2x16x32xf32>
    %102 = arith.addf %101, %0 : vector<2x16x32xf32>
    %c0_30 = arith.constant 0 : index
    %c0_31 = arith.constant 0 : index
    %c0_32 = arith.constant 0 : index
    %103 = vector.load %arg4[%c0_30, %c0_31, %c0_32] : memref<2x16x32xf32, #tpu.memory_space<vmem>>, vector<2x16x32xf32>
    tpu.vector_store %arg4[%c0_30, %c0_31, %c0_32], %102 {strides = array<i32>} : memref<2x16x32xf32, #tpu.memory_space<vmem>>, vector<2x16x32xf32>,
    return
  }
}

</mosaic_0001>

<llo_original>
// kernel: inverted_residual_se.1
$region0: #{inverted_residual_se.1}
  #allocation0 [shape = 'u32[]', space=smem, size = 0x4, offset = 0x4, fixed_abs, tag = 'smem constant byte address 0x4 - core index']
  #allocation1 [shape = 'u32[144,128]{1,0:T(1,128)}', space=vmem, size = 0x12000, scoped, tag = 'internal scratch']
  %s0 = inlined_call_operand.vmem [shape: f32[2,16,32], index: 0, kind: input, shape index: {}]
  %s1 = inlined_call_operand.hbm [shape: f32[4,32,32], index: 1, kind: input, shape index: {}]
  %s2 = inlined_call_operand.vmem [shape: f32[32,8], index: 2, kind: input, shape index: {}]
  %s3 = inlined_call_operand.vmem [shape: f32[2,32], index: 3, kind: input, shape index: {}]
  %s4 = inlined_call_operand.hbm [shape: f32[2,16,32], index: 4, kind: output, shape index: {}]
  %s5 = sld [smem:[#allocation0]]
  $region30: #{inverted_residual_se.1} parent=0
    _
  %s7 = ssub.s32 1, %s5
  %s8 = scalar_select 0, %s7, %s5
  $region1: #{inverted_residual_se.1} parent=0
    #allocation2 [shape = 'u8[65536]{0}', space=vmem, size = 0x10000, scoped, tag = 'input window, operand 1, single buffered']
    #allocation3 [shape = 's32[1]{0}', space=sflag, size = 0x4, scoped, tag = 'scoped memory for inverted_residual_se.1']
    #allocation4 [shape = 's32[1]{0}', space=sflag, size = 0x4, scoped, tag = 'scoped memory for inverted_residual_se.1']
    #allocation5 [shape = 'u8[16384]{0}', space=vmem, size = 0x4000, scoped, tag = 'output window, operand 0, single buffered']
    %9 = vsyncpa [#allocation3], 0
    %10 = vsyncpa [#allocation4], 0
    // Predicated region
    $region2: #{inverted_residual_se.1} parent=1 // pred_check
      _
    $region3: #{inverted_residual_se.1} parent=1 // pred_check_branch
      %12 = sbr.rel (0) target = $region5
    $region4: #{inverted_residual_se.1} parent=1 // pred_region
      _
    $region5: #{inverted_residual_se.1} parent=1 // pred_fallthru
      _
    // Predicated region
    $region6: #{inverted_residual_se.1} parent=1 // pred_check
      _
    $region7: #{inverted_residual_se.1} parent=1 // pred_check_branch
      %14 = sbr.rel (0) target = $region9
    $region8: #{inverted_residual_se.1} parent=1 // pred_region
      %s16 = ssub.s32 2048, 2048
      %17 = vsyncadd [#allocation3], %s16
      %s18 = sshll.u32 [#allocation2], 4
      %s19 = int_to_ptr.vmem [resolvable:$true] %s18
      %24 = dma.hbm_to_vmem [thread:$0]  %s1, 2048, %s19, [#allocation3], 128, 128, 8
    $region9: #{inverted_residual_se.1} parent=1 // pred_fallthru
      _
    // Predicated region
    $region10: #{inverted_residual_se.1} parent=1 // pred_check
      _
    $region11: #{inverted_residual_se.1} parent=1 // pred_check_branch
      %26 = sbr.rel (0) target = $region13
    $region12: #{inverted_residual_se.1} parent=1 // pred_region
      _
    $region13: #{inverted_residual_se.1} parent=1 // pred_fallthru
      _
    // Predicated region
    $region14: #{inverted_residual_se.1} parent=1 // pred_check
      _
    $region15: #{inverted_residual_se.1} parent=1 // pred_check_branch
      %28 = sbr.rel (0) target = $region17
    $region16: #{inverted_residual_se.1} parent=1 // pred_region
      _
    $region17: #{inverted_residual_se.1} parent=1 // pred_fallthru
      _
    // Predicated region
    $region18: #{inverted_residual_se.1} parent=1 // pred_check
      _
    $region19: #{inverted_residual_se.1} parent=1 // pred_check_branch
      %30 = sbr.rel (0) target = $region21
    $region20: #{inverted_residual_se.1} parent=1 // pred_region
      %31 = dma.done [#allocation3], 2048
    $region21: #{inverted_residual_se.1} parent=1 // pred_fallthru
      _
    %v32 = vld [vmem:[%s0] sm:$0xff]
    %v33 = vld [vmem:[%s0 + $0x8] sm:$0xff]
    %v34 = vld [vmem:[%s0 + $0x10] sm:$0xff]
    %v35 = vld [vmem:[%s0 + $0x18] sm:$0xff]
    %v36 = vld [vmem:[#allocation2] sm:$0xff]
    %v37 = vld [vmem:[#allocation2 + $0x8] sm:$0xff]
    %v38 = vld [vmem:[#allocation2 + $0x10] sm:$0xff]
    %v39 = vld [vmem:[#allocation2 + $0x18] sm:$0xff]
    %s40 = scalar_lea.vmem [#allocation2], 32
    %v41 = vld [vmem:[%s40] sm:$0xff]
    %v42 = vld [vmem:[%s40 + $0x8] sm:$0xff]
    %s43 = scalar_lea.vmem [#allocation2], 64
    %v44 = vld [vmem:[%s43] sm:$0xff]
    %v45 = vld [vmem:[%s43 + $0x8] sm:$0xff]
    %v46 = vld [vmem:[%s43 + $0x10] sm:$0xff]
    %v47 = vld [vmem:[%s43 + $0x18] sm:$0xff]
    %s48 = scalar_lea.vmem [#allocation2], 96
    %v49 = vld [vmem:[%s48] sm:$0xff]
    %v50 = vld [vmem:[%s2] sm:$0xff]
    %v51 = vld [vmem:[%s2 + $0x8] sm:$0xff]
    %v52 = vld [vmem:[%s2 + $0x10] sm:$0xff]
    %v53 = vld [vmem:[%s2 + $0x18] sm:$0xff]
    %v54 = vld [vmem:[%s3] sm:$0x3]
    %56 = vset.pattern.permute.xlu0 0
    %57 = vperm.xlu0 %56, %v50
    %v58 = vpop.permute.xlu0 %57
    %61 = vset.pattern.permute.xlu0 0
    %62 = vperm.xlu0 %61, %v51
    %v63 = vpop.permute.xlu0 %62
    %66 = vset.pattern.permute.xlu0 0
    %67 = vperm.xlu0 %66, %v52
    %v68 = vpop.permute.xlu0 %67
    %71 = vset.pattern.permute.xlu0 0
    %72 = vperm.xlu0 %71, %v53
    %v73 = vpop.permute.xlu0 %72
    %vm75 = vcmask 130048
    %v77 = vsel %vm75, %v36, 0
    %v80 = vsel %vm75, %v37, 0
    %v83 = vsel %vm75, %v38, 0
    %v86 = vsel %vm75, %v39, 0
    %88 = vmatprep.subr.mxu0 0.0
    %89 = vmatpush1.msra.mxu0 %v32
    %90 = vmatprep.subr.mxu0 0.0
    %91 = vmatpush1.msra.mxu0 %v33
    %92 = vmatprep.subr.mxu0 0.0
    %93 = vmatpush1.msra.mxu0 0.0
    %94 = vmatprep.subr.mxu0 0.0
    %95 = vmatpush1.msra.mxu0 0.0
    %96 = vmatprep.subr.mxu0 0.0
    %97 = vmatpush1.msra.mxu0 0.0
    %98 = vmatprep.subr.mxu0 0.0
    %99 = vmatpush1.msra.mxu0 0.0
    %100 = vmatprep.subr.mxu0 0.0
    %101 = vmatpush1.msra.mxu0 0.0
    %102 = vmatprep.subr.mxu0 0.0
    %103 = vmatpush1.msra.mxu0 0.0
    %104 = vmatprep.subr.mxu0 0.0
    %105 = vmatpush1.msra.mxu0 0.0
    %106 = vmatprep.subr.mxu0 0.0
    %107 = vmatpush1.msra.mxu0 0.0
    %108 = vmatprep.subr.mxu0 0.0
    %109 = vmatpush1.msra.mxu0 0.0
    %110 = vmatprep.subr.mxu0 0.0
    %111 = vmatpush1.msra.mxu0 0.0
    %112 = vmatprep.subr.mxu0 0.0
    %113 = vmatpush1.msra.mxu0 0.0
    %114 = vmatprep.subr.mxu0 0.0
    %115 = vmatpush1.msra.mxu0 0.0
    %116 = vmatprep.subr.mxu0 0.0
    %117 = vmatpush1.msra.mxu0 0.0
    %118 = vmatprep.subr.mxu0 0.0
    %119 = vmatpush1.msra.mxu0 0.0
    %120 = vmatprep.subr.mxu0 0.0
    %121 = vmatpush1.msra.mxu0 0.0
    %122 = vmatprep.subr.mxu0 0.0
    %123 = vmatpush1.msra.mxu0 0.0
    %124 = vmatprep.subr.mxu0 0.0
    %125 = vmatpush1.msra.mxu0 0.0
    %126 = vmatprep.subr.mxu0 0.0
    %127 = vmatpush1.msra.mxu0 0.0
    %128 = vmatprep.subr.mxu0 0.0
    %129 = vmatpush1.msra.mxu0 0.0
    %130 = vmatprep.subr.mxu0 0.0
    %131 = vmatpush1.msra.mxu0 0.0
    %132 = vmatprep.subr.mxu0 0.0
    %133 = vmatpush1.msra.mxu0 0.0
    %134 = vmatprep.subr.mxu0 0.0
    %135 = vmatpush1.msra.mxu0 0.0
    %136 = vmatprep.subr.mxu0 0.0
    %137 = vmatpush1.msra.mxu0 0.0
    %138 = vmatprep.subr.mxu0 0.0
    %139 = vmatpush1.msra.mxu0 0.0
    %140 = vmatprep.subr.mxu0 0.0
    %141 = vmatpush1.msra.mxu0 0.0
    %142 = vmatprep.subr.mxu0 0.0
    %143 = vmatpush1.msra.mxu0 0.0
    %144 = vmatprep.subr.mxu0 0.0
    %145 = vmatpush1.msra.mxu0 0.0
    %146 = vmatprep.subr.mxu0 0.0
    %147 = vmatpush1.msra.mxu0 0.0
    %148 = vmatprep.subr.mxu0 0.0
    %149 = vmatpush1.msra.mxu0 0.0
    %150 = vmatprep.subr.mxu0 0.0
    %151 = vmatpush1.msra.mxu0 0.0
    %152 = vmatprep.mubr.f32.mxu0 0.0
    %153 = vmatmul.mubr.f32.gmra.mrb[0].mxu0 %v77
    %v154 = vpop.f32.mrb[0].mxu0
    %v155 = vadd.f32 %v58, %v154
    %v156 = vpop.f32.mrb[0].mxu0
    %157 = vmatprep.mubr.f32.mxu0 0.0
    %158 = vmatmul.mubr.f32.gmra.mrb[0].mxu0 %v80
    %v159 = vpop.f32.mrb[0].mxu0
    %v160 = vadd.f32 %v63, %v159
    %v161 = vpop.f32.mrb[0].mxu0
    %162 = vmatprep.mubr.f32.mxu0 0.0
    %163 = vmatmul.mubr.f32.gmra.mrb[0].mxu0 %v83
    %v164 = vpop.f32.mrb[0].mxu0
    %v165 = vadd.f32 %v68, %v164
    %v166 = vpop.f32.mrb[0].mxu0
    %167 = vmatprep.mubr.f32.mxu0 0.0
    %168 = vmatmul.mubr.f32.gmra.mrb[0].mxu0 %v86
    %v169 = vpop.f32.mrb[0].mxu0
    %v170 = vadd.f32 %v73, %v169
    %v171 = vpop.f32.mrb[0].mxu0
    %172 = vdwg.mxu0
    %173 = vmatprep.subr.mxu0 0.0
    %174 = vmatpush1.msra.mxu0 %v34
    %175 = vmatprep.subr.mxu0 0.0
    %176 = vmatpush1.msra.mxu0 %v35
    %177 = vmatprep.subr.mxu0 0.0
    %178 = vmatpush1.msra.mxu0 0.0
    %179 = vmatprep.subr.mxu0 0.0
    %180 = vmatpush1.msra.mxu0 0.0
    %181 = vmatprep.subr.mxu0 0.0
    %182 = vmatpush1.msra.mxu0 0.0
    %183 = vmatprep.subr.mxu0 0.0
    %184 = vmatpush1.msra.mxu0 0.0
    %185 = vmatprep.subr.mxu0 0.0
    %186 = vmatpush1.msra.mxu0 0.0
    %187 = vmatprep.subr.mxu0 0.0
    %188 = vmatpush1.msra.mxu0 0.0
    %189 = vmatprep.subr.mxu0 0.0
    %190 = vmatpush1.msra.mxu0 0.0
    %191 = vmatprep.subr.mxu0 0.0
    %192 = vmatpush1.msra.mxu0 0.0
    %193 = vmatprep.subr.mxu0 0.0
    %194 = vmatpush1.msra.mxu0 0.0
    %195 = vmatprep.subr.mxu0 0.0
    %196 = vmatpush1.msra.mxu0 0.0
    %197 = vmatprep.subr.mxu0 0.0
    %198 = vmatpush1.msra.mxu0 0.0
    %199 = vmatprep.subr.mxu0 0.0
    %200 = vmatpush1.msra.mxu0 0.0
    %201 = vmatprep.subr.mxu0 0.0
    %202 = vmatpush1.msra.mxu0 0.0
    %203 = vmatprep.subr.mxu0 0.0
    %204 = vmatpush1.msra.mxu0 0.0
    %205 = vmatprep.subr.mxu0 0.0
    %206 = vmatpush1.msra.mxu0 0.0
    %207 = vmatprep.subr.mxu0 0.0
    %208 = vmatpush1.msra.mxu0 0.0
    %209 = vmatprep.subr.mxu0 0.0
    %210 = vmatpush1.msra.mxu0 0.0
    %211 = vmatprep.subr.mxu0 0.0
    %212 = vmatpush1.msra.mxu0 0.0
    %213 = vmatprep.subr.mxu0 0.0
    %214 = vmatpush1.msra.mxu0 0.0
    %215 = vmatprep.subr.mxu0 0.0
    %216 = vmatpush1.msra.mxu0 0.0
    %217 = vmatprep.subr.mxu0 0.0
    %218 = vmatpush1.msra.mxu0 0.0
    %219 = vmatprep.subr.mxu0 0.0
    %220 = vmatpush1.msra.mxu0 0.0
    %221 = vmatprep.subr.mxu0 0.0
    %222 = vmatpush1.msra.mxu0 0.0
    %223 = vmatprep.subr.mxu0 0.0
    %224 = vmatpush1.msra.mxu0 0.0
    %225 = vmatprep.subr.mxu0 0.0
    %226 = vmatpush1.msra.mxu0 0.0
    %227 = vmatprep.subr.mxu0 0.0
    %228 = vmatpush1.msra.mxu0 0.0
    %229 = vmatprep.subr.mxu0 0.0
    %230 = vmatpush1.msra.mxu0 0.0
    %231 = vmatprep.subr.mxu0 0.0
    %232 = vmatpush1.msra.mxu0 0.0
    %233 = vmatprep.subr.mxu0 0.0
    %234 = vmatpush1.msra.mxu0 0.0
    %235 = vmatprep.subr.mxu0 0.0
    %236 = vmatpush1.msra.mxu0 0.0
    %237 = vmatprep.mubr.f32.mxu0 0.0
    %238 = vmatmul.mubr.f32.gmra.mrb[0].mxu0 %v77
    %v239 = vpop.f32.mrb[0].mxu0
    %v240 = vadd.f32 %v58, %v239
    %v241 = vpop.f32.mrb[0].mxu0
    %242 = vmatprep.mubr.f32.mxu0 0.0
    %243 = vmatmul.mubr.f32.gmra.mrb[0].mxu0 %v80
    %v244 = vpop.f32.mrb[0].mxu0
    %v245 = vadd.f32 %v63, %v244
    %v246 = vpop.f32.mrb[0].mxu0
    %247 = vmatprep.mubr.f32.mxu0 0.0
    %248 = vmatmul.mubr.f32.gmra.mrb[0].mxu0 %v83
    %v249 = vpop.f32.mrb[0].mxu0
    %v250 = vadd.f32 %v68, %v249
    %v251 = vpop.f32.mrb[0].mxu0
    %252 = vmatprep.mubr.f32.mxu0 0.0
    %253 = vmatmul.mubr.f32.gmra.mrb[0].mxu0 %v86
    %v254 = vpop.f32.mrb[0].mxu0
    %v255 = vadd.f32 %v73, %v254
    %v256 = vpop.f32.mrb[0].mxu0
    %257 = vdwg.mxu0
    %v258 = vmax.f32 %v155, 0.0
    %v259 = vmax.f32 %v160, 0.0
    %v260 = vmax.f32 %v165, 0.0
    %v261 = vmax.f32 %v170, 0.0
    %v262 = vmax.f32 %v240, 0.0
    %v263 = vmax.f32 %v245, 0.0
    %v264 = vmax.f32 %v250, 0.0
    %v265 = vmax.f32 %v255, 0.0
    %v266 = vlaneseq
    %v267 = vand.u32 %v266, 127
    %vm268 = vcmask 1047808
    %269 = vrot.lane.b32.xlu0 %v258, 32
    %v270 = vpop.permute.xlu0 %269
    %v271 = vsel %vm268, %v270, %v258
    %272 = vrot.lane.b32.xlu0 %v259, 32
    %v273 = vpop.permute.xlu0 %272
    %v274 = vsel %vm268, %v273, %v259
    %275 = vrot.lane.b32.xlu0 %v260, 32
    %v276 = vpop.permute.xlu0 %275
    %v277 = vsel %vm268, %v276, %v260
    %278 = vrot.lane.b32.xlu0 %v261, 32
    %v279 = vpop.permute.xlu0 %278
    %v280 = vsel %vm268, %v279, %v261
    %281 = vrot.lane.b32.xlu0 %v262, 32
    %v282 = vpop.permute.xlu0 %281
    %v283 = vsel %vm268, %v282, %v262
    %284 = vrot.lane.b32.xlu0 %v263, 32
    %v285 = vpop.permute.xlu0 %284
    %v286 = vsel %vm268, %v285, %v263
    %287 = vrot.lane.b32.xlu0 %v264, 32
    %v288 = vpop.permute.xlu0 %287
    %v289 = vsel %vm268, %v288, %v264
    %290 = vrot.lane.b32.xlu0 %v265, 32
    %v291 = vpop.permute.xlu0 %290
    %v292 = vsel %vm268, %v291, %v265
    %293 = vrot.lane.b32.xlu0 %v271, 32
    %v294 = vpop.permute.xlu0 %293
    %295 = vrot.lane.b32.xlu0 %v274, 32
    %v296 = vpop.permute.xlu0 %295
    %297 = vrot.lane.b32.xlu0 %v277, 32
    %v298 = vpop.permute.xlu0 %297
    %299 = vrot.lane.b32.xlu0 %v280, 32
    %v300 = vpop.permute.xlu0 %299
    %301 = vrot.lane.b32.xlu0 %v283, 32
    %v302 = vpop.permute.xlu0 %301
    %303 = vrot.lane.b32.xlu0 %v286, 32
    %v304 = vpop.permute.xlu0 %303
    %305 = vrot.lane.b32.xlu0 %v289, 32
    %v306 = vpop.permute.xlu0 %305
    %307 = vrot.lane.b32.xlu0 %v292, 32
    %v308 = vpop.permute.xlu0 %307
    %v309 = vsel %vm268, %v294, %v258
    %v310 = vsel %vm268, %v296, %v259
    %v311 = vsel %vm268, %v298, %v260
    %v312 = vsel %vm268, %v300, %v261
    %v313 = vsel %vm268, %v302, %v262
    %v314 = vsel %vm268, %v304, %v263
    %v315 = vsel %vm268, %v306, %v264
    %v316 = vsel %vm268, %v308, %v265
    %v317 = vsub.s32 %v267, 1
    %vm318 = vcmp.ge.s32.totalorder %v317, 0
    %vm319 = vcmp.lt.s32.totalorder %v317, 32
    %vm320 = vmand %vm318, %vm319
    %v321 = vsel %vm320, 1, 0
    %v322 = vcvt.s32.f32 %v321
    %323 = vset.pattern.permute.xlu0 3
    %324 = vperm.xlu0 %323, %v50
    %v325 = vpop.permute.xlu0 %324
    %327 = vset.pattern.permute.xlu0 3
    %328 = vperm.xlu0 %327, %v51
    %v329 = vpop.permute.xlu0 %328
    %331 = vset.pattern.permute.xlu0 3
    %332 = vperm.xlu0 %331, %v52
    %v333 = vpop.permute.xlu0 %332
    %335 = vset.pattern.permute.xlu0 3
    %336 = vperm.xlu0 %335, %v53
    %v337 = vpop.permute.xlu0 %336
    %v339 = vmul.f32 %v325, %v322
    %v340 = vmul.f32 %v329, %v322
    %v341 = vmul.f32 %v333, %v322
    %v342 = vmul.f32 %v337, %v322
    %347 = vrot.lane.b32.xlu0 %v339, 31
    %v348 = vpop.permute.xlu0 %347
    %349 = vrot.lane.b32.xlu0 %v340, 31
    %v350 = vpop.permute.xlu0 %349
    %351 = vrot.lane.b32.xlu0 %v341, 31
    %v352 = vpop.permute.xlu0 %351
    %353 = vrot.lane.b32.xlu0 %v342, 31
    %v354 = vpop.permute.xlu0 %353
    %v359 = vmul.f32 %v309, %v348
    %v360 = vmul.f32 %v310, %v350
    %v361 = vmul.f32 %v311, %v352
    %v362 = vmul.f32 %v312, %v354
    %v363 = vmul.f32 %v313, %v348
    %v364 = vmul.f32 %v314, %v350
    %v365 = vmul.f32 %v315, %v352
    %v366 = vmul.f32 %v316, %v354
    %367 = vset.pattern.permute.xlu0 4
    %368 = vperm.xlu0 %367, %v50
    %v369 = vpop.permute.xlu0 %368
    %371 = vset.pattern.permute.xlu0 4
    %372 = vperm.xlu0 %371, %v51
    %v373 = vpop.permute.xlu0 %372
    %375 = vset.pattern.permute.xlu0 4
    %376 = vperm.xlu0 %375, %v52
    %v377 = vpop.permute.xlu0 %376
    %379 = vset.pattern.permute.xlu0 4
    %380 = vperm.xlu0 %379, %v53
    %v381 = vpop.permute.xlu0 %380
    %v383 = vmul.f32 %v258, %v369
    %v384 = vmul.f32 %v259, %v373
    %v385 = vmul.f32 %v260, %v377
    %v386 = vmul.f32 %v261, %v381
    %v387 = vmul.f32 %v262, %v369
    %v388 = vmul.f32 %v263, %v373
    %v389 = vmul.f32 %v264, %v377
    %v390 = vmul.f32 %v265, %v381
    %399 = vrot.lane.b32.xlu0 %v383, 31
    %v400 = vpop.permute.xlu0 %399
    %401 = vrot.lane.b32.xlu0 %v384, 31
    %v402 = vpop.permute.xlu0 %401
    %403 = vrot.lane.b32.xlu0 %v385, 31
    %v404 = vpop.permute.xlu0 %403
    %405 = vrot.lane.b32.xlu0 %v386, 31
    %v406 = vpop.permute.xlu0 %405
    %407 = vrot.lane.b32.xlu0 %v387, 31
    %v408 = vpop.permute.xlu0 %407
    %409 = vrot.lane.b32.xlu0 %v388, 31
    %v410 = vpop.permute.xlu0 %409
    %411 = vrot.lane.b32.xlu0 %v389, 31
    %v412 = vpop.permute.xlu0 %411
    %413 = vrot.lane.b32.xlu0 %v390, 31
    %v414 = vpop.permute.xlu0 %413
    %v423 = vadd.f32 %v359, %v400
    %v424 = vadd.f32 %v360, %v402
    %v425 = vadd.f32 %v361, %v404
    %v426 = vadd.f32 %v362, %v406
    %v427 = vadd.f32 %v363, %v408
    %v428 = vadd.f32 %v364, %v410
    %v429 = vadd.f32 %v365, %v412
    %v430 = vadd.f32 %v366, %v414
    %v431 = vsub.s32 %v267, 4294967295
    %vm432 = vcmp.ge.s32.totalorder %v431, 0
    %vm433 = vcmp.lt.s32.totalorder %v431, 32
    %vm434 = vmand %vm432, %vm433
    %v435 = vsel %vm434, 1, 0
    %v436 = vcvt.s32.f32 %v435
    %437 = vset.pattern.permute.xlu0 5
    %438 = vperm.xlu0 %437, %v50
    %v439 = vpop.permute.xlu0 %438
    %441 = vset.pattern.permute.xlu0 5
    %442 = vperm.xlu0 %441, %v51
    %v443 = vpop.permute.xlu0 %442
    %445 = vset.pattern.permute.xlu0 5
    %446 = vperm.xlu0 %445, %v52
    %v447 = vpop.permute.xlu0 %446
    %449 = vset.pattern.permute.xlu0 5
    %450 = vperm.xlu0 %449, %v53
    %v451 = vpop.permute.xlu0 %450
    %v453 = vmul.f32 %v439, %v436
    %v454 = vmul.f32 %v443, %v436
    %v455 = vmul.f32 %v447, %v436
    %v456 = vmul.f32 %v451, %v436
    %461 = vrot.lane.b32.xlu0 %v453, 1
    %v462 = vpop.permute.xlu0 %461
    %463 = vrot.lane.b32.xlu0 %v454, 1
    %v464 = vpop.permute.xlu0 %463
    %465 = vrot.lane.b32.xlu0 %v455, 1
    %v466 = vpop.permute.xlu0 %465
    %467 = vrot.lane.b32.xlu0 %v456, 1
    %v468 = vpop.permute.xlu0 %467
    %v473 = vmul.f32 %v309, %v462
    %v474 = vmul.f32 %v310, %v464
    %v475 = vmul.f32 %v311, %v466
    %v476 = vmul.f32 %v312, %v468
    %v477 = vmul.f32 %v313, %v462
    %v478 = vmul.f32 %v314, %v464
    %v479 = vmul.f32 %v315, %v466
    %v480 = vmul.f32 %v316, %v468
    %489 = vrot.lane.b32.xlu0 %v473, 30
    %v490 = vpop.permute.xlu0 %489
    %491 = vrot.lane.b32.xlu0 %v474, 30
    %v492 = vpop.permute.xlu0 %491
    %493 = vrot.lane.b32.xlu0 %v475, 30
    %v494 = vpop.permute.xlu0 %493
    %495 = vrot.lane.b32.xlu0 %v476, 30
    %v496 = vpop.permute.xlu0 %495
    %497 = vrot.lane.b32.xlu0 %v477, 30
    %v498 = vpop.permute.xlu0 %497
    %499 = vrot.lane.b32.xlu0 %v478, 30
    %v500 = vpop.permute.xlu0 %499
    %501 = vrot.lane.b32.xlu0 %v479, 30
    %v502 = vpop.permute.xlu0 %501
    %503 = vrot.lane.b32.xlu0 %v480, 30
    %v504 = vpop.permute.xlu0 %503
    %v513 = vadd.f32 %v423, %v490
    %v514 = vadd.f32 %v424, %v492
    %v515 = vadd.f32 %v425, %v494
    %v516 = vadd.f32 %v426, %v496
    %v517 = vadd.f32 %v427, %v498
    %v518 = vadd.f32 %v428, %v500
    %v519 = vadd.f32 %v429, %v502
    %v520 = vadd.f32 %v430, %v504
    %521 = vset.pattern.permute.xlu0 1
    %522 = vperm.xlu0 %521, %v50
    %v523 = vpop.permute.xlu0 %522
    %525 = vset.pattern.permute.xlu0 1
    %526 = vperm.xlu0 %525, %v51
    %v527 = vpop.permute.xlu0 %526
    %529 = vset.pattern.permute.xlu0 1
    %530 = vperm.xlu0 %529, %v52
    %v531 = vpop.permute.xlu0 %530
    %533 = vset.pattern.permute.xlu0 1
    %534 = vperm.xlu0 %533, %v53
    %v535 = vpop.permute.xlu0 %534
    %v537 = vadd.f32 %v513, %v523
    %v538 = vadd.f32 %v514, %v527
    %v539 = vadd.f32 %v515, %v531
    %v540 = vadd.f32 %v516, %v535
    %v541 = vadd.f32 %v517, %v523
    %v542 = vadd.f32 %v518, %v527
    %v543 = vadd.f32 %v519, %v531
    %v544 = vadd.f32 %v520, %v535
    %v545 = vmax.f32 %v537, 0.0
    %v546 = vmax.f32 %v538, 0.0
    %v547 = vmax.f32 %v539, 0.0
    %v548 = vmax.f32 %v540, 0.0
    %v549 = vmax.f32 %v541, 0.0
    %v550 = vmax.f32 %v542, 0.0
    %v551 = vmax.f32 %v543, 0.0
    %v552 = vmax.f32 %v544, 0.0
    %561 = vrot.lane.b32.xlu0 %v545, 97
    %v562 = vpop.permute.xlu0 %561
    %563 = vrot.lane.b32.xlu0 %v546, 97
    %v564 = vpop.permute.xlu0 %563
    %565 = vrot.lane.b32.xlu0 %v547, 97
    %v566 = vpop.permute.xlu0 %565
    %567 = vrot.lane.b32.xlu0 %v548, 97
    %v568 = vpop.permute.xlu0 %567
    %569 = vrot.lane.b32.xlu0 %v549, 97
    %v570 = vpop.permute.xlu0 %569
    %571 = vrot.lane.b32.xlu0 %v550, 97
    %v572 = vpop.permute.xlu0 %571
    %573 = vrot.lane.b32.xlu0 %v551, 97
    %v574 = vpop.permute.xlu0 %573
    %575 = vrot.lane.b32.xlu0 %v552, 97
    %v576 = vpop.permute.xlu0 %575
    %vm585 = vcmask 261120
    %v586 = vsel %vm585, %v562, 0.0
    %587 = vadd.xlane.f32.xlu0 %v586
    %v588 = vpop.xlane.xlu0 %587
    %v589 = vsel %vm585, %v564, 0.0
    %590 = vadd.xlane.f32.xlu0 %v589
    %v591 = vpop.xlane.xlu0 %590
    %v592 = vsel %vm585, %v566, 0.0
    %593 = vadd.xlane.f32.xlu0 %v592
    %v594 = vpop.xlane.xlu0 %593
    %v595 = vsel %vm585, %v568, 0.0
    %596 = vadd.xlane.f32.xlu0 %v595
    %v597 = vpop.xlane.xlu0 %596
    %v598 = vsel %vm585, %v570, 0.0
    %599 = vadd.xlane.f32.xlu0 %v598
    %v600 = vpop.xlane.xlu0 %599
    %v601 = vsel %vm585, %v572, 0.0
    %602 = vadd.xlane.f32.xlu0 %v601
    %v603 = vpop.xlane.xlu0 %602
    %v604 = vsel %vm585, %v574, 0.0
    %605 = vadd.xlane.f32.xlu0 %v604
    %v606 = vpop.xlane.xlu0 %605
    %v607 = vsel %vm585, %v576, 0.0
    %608 = vadd.xlane.f32.xlu0 %v607
    %v609 = vpop.xlane.xlu0 %608
    %v610 = vmul.f32 %v588, 0.03125
    %v611 = vmul.f32 %v591, 0.03125
    %v612 = vmul.f32 %v594, 0.03125
    %v613 = vmul.f32 %v597, 0.03125
    %v614 = vmul.f32 %v600, 0.03125
    %v615 = vmul.f32 %v603, 0.03125
    %v616 = vmul.f32 %v606, 0.03125
    %v617 = vmul.f32 %v609, 0.03125
    %v618 = vlaneseq
    %v619 = vshrl.u32 %v618, 7
    %v620 = vsub.s32 0, %v619
    %v621 = vrot.slane %v54, %v620
    %v630 = vlaneseq
    %v631 = vshrl.u32 %v630, 7
    %v632 = vsub.s32 %v267, %v631
    %v633 = vrot.slane %v610, %v632
    %v634 = vadd.s32 %v267, 4294967288
    %v635 = vlaneseq
    %v636 = vshrl.u32 %v635, 7
    %v637 = vsub.s32 %v634, %v636
    %v638 = vrot.slane %v611, %v637
    %vm639 = vcmask 130112
    %v640 = vsel %vm639, %v638, %v633
    %v641 = vadd.s32 %v267, 4294967280
    %v642 = vlaneseq
    %v643 = vshrl.u32 %v642, 7
    %v644 = vsub.s32 %v641, %v643
    %v645 = vrot.slane %v612, %v644
    %vm646 = vcmask 195712
    %v647 = vsel %vm646, %v645, %v640
    %v648 = vadd.s32 %v267, 4294967272
    %v649 = vlaneseq
    %v650 = vshrl.u32 %v649, 7
    %v651 = vsub.s32 %v648, %v650
    %v652 = vrot.slane %v613, %v651
    %vm653 = vcmask 261312
    %v654 = vsel %vm653, %v652, %v647
    %v655 = vlaneseq
    %v656 = vshrl.u32 %v655, 7
    %v657 = vsub.s32 %v267, %v656
    %v658 = vrot.slane %v614, %v657
    %v659 = vlaneseq
    %v660 = vshrl.u32 %v659, 7
    %v661 = vsub.s32 %v634, %v660
    %v662 = vrot.slane %v615, %v661
    %v663 = vsel %vm639, %v662, %v658
    %v664 = vlaneseq
    %v665 = vshrl.u32 %v664, 7
    %v666 = vsub.s32 %v641, %v665
    %v667 = vrot.slane %v616, %v666
    %v668 = vsel %vm646, %v667, %v663
    %v669 = vlaneseq
    %v670 = vshrl.u32 %v669, 7
    %v671 = vsub.s32 %v648, %v670
    %v672 = vrot.slane %v617, %v671
    %v673 = vsel %vm653, %v672, %v668
    %vm674 = vcmask 1041409
    %v675 = vsel %vm674, %v673, %v654
    %v676 = vsel %vm585, %v675, 0
    %678 = vmatprep.subr.mxu0 0.0
    %679 = vmatpush1.msra.mxu0 %v44
    %680 = vmatprep.subr.mxu0 0.0
    %681 = vmatpush1.msra.mxu0 %v45
    %682 = vmatprep.subr.mxu0 0.0
    %683 = vmatpush1.msra.mxu0 %v46
    %684 = vmatprep.subr.mxu0 0.0
    %685 = vmatpush1.msra.mxu0 %v47
    %686 = vmatprep.subr.mxu0 0.0
    %687 = vmatpush1.msra.mxu0 0.0
    %688 = vmatprep.subr.mxu0 0.0
    %689 = vmatpush1.msra.mxu0 0.0
    %690 = vmatprep.subr.mxu0 0.0
    %691 = vmatpush1.msra.mxu0 0.0
    %692 = vmatprep.subr.mxu0 0.0
    %693 = vmatpush1.msra.mxu0 0.0
    %694 = vmatprep.subr.mxu0 0.0
    %695 = vmatpush1.msra.mxu0 0.0
    %696 = vmatprep.subr.mxu0 0.0
    %697 = vmatpush1.msra.mxu0 0.0
    %698 = vmatprep.subr.mxu0 0.0
    %699 = vmatpush1.msra.mxu0 0.0
    %700 = vmatprep.subr.mxu0 0.0
    %701 = vmatpush1.msra.mxu0 0.0
    %702 = vmatprep.subr.mxu0 0.0
    %703 = vmatpush1.msra.mxu0 0.0
    %704 = vmatprep.subr.mxu0 0.0
    %705 = vmatpush1.msra.mxu0 0.0
    %706 = vmatprep.subr.mxu0 0.0
    %707 = vmatpush1.msra.mxu0 0.0
    %708 = vmatprep.subr.mxu0 0.0
    %709 = vmatpush1.msra.mxu0 0.0
    %710 = vmatprep.subr.mxu0 0.0
    %711 = vmatpush1.msra.mxu0 0.0
    %712 = vmatprep.subr.mxu0 0.0
    %713 = vmatpush1.msra.mxu0 0.0
    %714 = vmatprep.subr.mxu0 0.0
    %715 = vmatpush1.msra.mxu0 0.0
    %716 = vmatprep.subr.mxu0 0.0
    %717 = vmatpush1.msra.mxu0 0.0
    %718 = vmatprep.subr.mxu0 0.0
    %719 = vmatpush1.msra.mxu0 0.0
    %720 = vmatprep.subr.mxu0 0.0
    %721 = vmatpush1.msra.mxu0 0.0
    %722 = vmatprep.subr.mxu0 0.0
    %723 = vmatpush1.msra.mxu0 0.0
    %724 = vmatprep.subr.mxu0 0.0
    %725 = vmatpush1.msra.mxu0 0.0
    %726 = vmatprep.subr.mxu0 0.0
    %727 = vmatpush1.msra.mxu0 0.0
    %728 = vmatprep.subr.mxu0 0.0
    %729 = vmatpush1.msra.mxu0 0.0
    %730 = vmatprep.subr.mxu0 0.0
    %731 = vmatpush1.msra.mxu0 0.0
    %732 = vmatprep.subr.mxu0 0.0
    %733 = vmatpush1.msra.mxu0 0.0
    %734 = vmatprep.subr.mxu0 0.0
    %735 = vmatpush1.msra.mxu0 0.0
    %736 = vmatprep.subr.mxu0 0.0
    %737 = vmatpush1.msra.mxu0 0.0
    %738 = vmatprep.subr.mxu0 0.0
    %739 = vmatpush1.msra.mxu0 0.0
    %740 = vmatprep.subr.mxu0 0.0
    %741 = vmatpush1.msra.mxu0 0.0
    %742 = vmatprep.mubr.f32.mxu0 0.0
    %743 = vmatmul.mubr.f32.gmra.mrb[0].mxu0 %v676
    %v744 = vpop.f32.mrb[0].mxu0
    %v745 = vadd.f32 %v621, %v744
    %v746 = vpop.f32.mrb[0].mxu0
    %747 = vdwg.mxu0
    %v748 = vmax.f32 %v745, 0.0
    %v749 = vlaneseq
    %v750 = vshrl.u32 %v749, 7
    %v751 = vsub.s32 1, %v750
    %v752 = vrot.slane %v54, %v751
    %vm753 = vcmask 64512
    %v755 = vsel %vm753, %v748, 0
    %757 = vmatprep.subr.mxu0 0.0
    %758 = vmatpush1.msra.mxu0 %v49
    %759 = vmatprep.subr.mxu0 0.0
    %760 = vmatpush1.msra.mxu0 0.0
    %761 = vmatprep.subr.mxu0 0.0
    %762 = vmatpush1.msra.mxu0 0.0
    %763 = vmatprep.subr.mxu0 0.0
    %764 = vmatpush1.msra.mxu0 0.0
    %765 = vmatprep.subr.mxu0 0.0
    %766 = vmatpush1.msra.mxu0 0.0
    %767 = vmatprep.subr.mxu0 0.0
    %768 = vmatpush1.msra.mxu0 0.0
    %769 = vmatprep.subr.mxu0 0.0
    %770 = vmatpush1.msra.mxu0 0.0
    %771 = vmatprep.subr.mxu0 0.0
    %772 = vmatpush1.msra.mxu0 0.0
    %773 = vmatprep.subr.mxu0 0.0
    %774 = vmatpush1.msra.mxu0 0.0
    %775 = vmatprep.subr.mxu0 0.0
    %776 = vmatpush1.msra.mxu0 0.0
    %777 = vmatprep.subr.mxu0 0.0
    %778 = vmatpush1.msra.mxu0 0.0
    %779 = vmatprep.subr.mxu0 0.0
    %780 = vmatpush1.msra.mxu0 0.0
    %781 = vmatprep.subr.mxu0 0.0
    %782 = vmatpush1.msra.mxu0 0.0
    %783 = vmatprep.subr.mxu0 0.0
    %784 = vmatpush1.msra.mxu0 0.0
    %785 = vmatprep.subr.mxu0 0.0
    %786 = vmatpush1.msra.mxu0 0.0
    %787 = vmatprep.subr.mxu0 0.0
    %788 = vmatpush1.msra.mxu0 0.0
    %789 = vmatprep.subr.mxu0 0.0
    %790 = vmatpush1.msra.mxu0 0.0
    %791 = vmatprep.subr.mxu0 0.0
    %792 = vmatpush1.msra.mxu0 0.0
    %793 = vmatprep.subr.mxu0 0.0
    %794 = vmatpush1.msra.mxu0 0.0
    %795 = vmatprep.subr.mxu0 0.0
    %796 = vmatpush1.msra.mxu0 0.0
    %797 = vmatprep.subr.mxu0 0.0
    %798 = vmatpush1.msra.mxu0 0.0
    %799 = vmatprep.subr.mxu0 0.0
    %800 = vmatpush1.msra.mxu0 0.0
    %801 = vmatprep.subr.mxu0 0.0
    %802 = vmatpush1.msra.mxu0 0.0
    %803 = vmatprep.subr.mxu0 0.0
    %804 = vmatpush1.msra.mxu0 0.0
    %805 = vmatprep.subr.mxu0 0.0
    %806 = vmatpush1.msra.mxu0 0.0
    %807 = vmatprep.subr.mxu0 0.0
    %808 = vmatpush1.msra.mxu0 0.0
    %809 = vmatprep.subr.mxu0 0.0
    %810 = vmatpush1.msra.mxu0 0.0
    %811 = vmatprep.subr.mxu0 0.0
    %812 = vmatpush1.msra.mxu0 0.0
    %813 = vmatprep.subr.mxu0 0.0
    %814 = vmatpush1.msra.mxu0 0.0
    %815 = vmatprep.subr.mxu0 0.0
    %816 = vmatpush1.msra.mxu0 0.0
    %817 = vmatprep.subr.mxu0 0.0
    %818 = vmatpush1.msra.mxu0 0.0
    %819 = vmatprep.subr.mxu0 0.0
    %820 = vmatpush1.msra.mxu0 0.0
    %821 = vmatprep.mubr.f32.mxu0 0.0
    %822 = vmatmul.mubr.f32.gmra.mrb[0].mxu0 %v755
    %v823 = vpop.f32.mrb[0].mxu0
    %v824 = vadd.f32 %v752, %v823
    %v825 = vpop.f32.mrb[0].mxu0
    %826 = vdwg.mxu0
    %v827 = vmul.f32 %v824, 0.16666667
    %v828 = vadd.f32 %v827, 0.5
    %v829 = vmax.f32 %v828, 0.0
    %v830 = vmin.f32 %v829, 1.0
    %v831 = vlaneseq
    %v832 = vshrl.u32 %v831, 7
    %v833 = vsub.s32 0, %v832
    %v834 = vrot.slane %v830, %v833
    %836 = vbcast.lane.b32.xlu0 %v834, 256
    %v837 = vpop.permute.xlu0 %836
    %s839 = sor.u32 256, 8
    %840 = vbcast.lane.b32.xlu0 %v834, %s839
    %v841 = vpop.permute.xlu0 %840
    %s843 = sor.u32 256, 16
    %844 = vbcast.lane.b32.xlu0 %v834, %s843
    %v845 = vpop.permute.xlu0 %844
    %s847 = sor.u32 256, 24
    %848 = vbcast.lane.b32.xlu0 %v834, %s847
    %v849 = vpop.permute.xlu0 %848
    %v850 = vlaneseq
    %v851 = vshrl.u32 %v850, 7
    %v852 = vsub.s32 1, %v851
    %v853 = vrot.slane %v830, %v852
    %855 = vbcast.lane.b32.xlu0 %v853, 256
    %v856 = vpop.permute.xlu0 %855
    %s858 = sor.u32 256, 8
    %859 = vbcast.lane.b32.xlu0 %v853, %s858
    %v860 = vpop.permute.xlu0 %859
    %s862 = sor.u32 256, 16
    %863 = vbcast.lane.b32.xlu0 %v853, %s862
    %v864 = vpop.permute.xlu0 %863
    %s866 = sor.u32 256, 24
    %867 = vbcast.lane.b32.xlu0 %v853, %s866
    %v868 = vpop.permute.xlu0 %867
    %v869 = vmul.f32 %v545, %v837
    %v870 = vmul.f32 %v546, %v841
    %v871 = vmul.f32 %v547, %v845
    %v872 = vmul.f32 %v548, %v849
    %v873 = vmul.f32 %v549, %v856
    %v874 = vmul.f32 %v550, %v860
    %v875 = vmul.f32 %v551, %v864
    %v876 = vmul.f32 %v552, %v868
    %877 = vset.pattern.permute.xlu0 2
    %878 = vperm.xlu0 %877, %v50
    %v879 = vpop.permute.xlu0 %878
    %881 = vset.pattern.permute.xlu0 2
    %882 = vperm.xlu0 %881, %v51
    %v883 = vpop.permute.xlu0 %882
    %889 = vrot.lane.b32.xlu0 %v869, 97
    %v890 = vpop.permute.xlu0 %889
    %891 = vrot.lane.b32.xlu0 %v870, 97
    %v892 = vpop.permute.xlu0 %891
    %893 = vrot.lane.b32.xlu0 %v871, 97
    %v894 = vpop.permute.xlu0 %893
    %895 = vrot.lane.b32.xlu0 %v872, 97
    %v896 = vpop.permute.xlu0 %895
    %v902 = vsel %vm585, %v41, 0
    %v905 = vsel %vm585, %v42, 0
    %907 = vmatprep.subr.mxu0 0.0
    %908 = vmatpush1.msra.mxu0 %v890
    %909 = vmatprep.subr.mxu0 0.0
    %910 = vmatpush1.msra.mxu0 %v892
    %911 = vmatprep.subr.mxu0 0.0
    %912 = vmatpush1.msra.mxu0 %v894
    %913 = vmatprep.subr.mxu0 0.0
    %914 = vmatpush1.msra.mxu0 %v896
    %915 = vmatprep.subr.mxu0 0.0
    %916 = vmatpush1.msra.mxu0 0.0
    %917 = vmatprep.subr.mxu0 0.0
    %918 = vmatpush1.msra.mxu0 0.0
    %919 = vmatprep.subr.mxu0 0.0
    %920 = vmatpush1.msra.mxu0 0.0
    %921 = vmatprep.subr.mxu0 0.0
    %922 = vmatpush1.msra.mxu0 0.0
    %923 = vmatprep.subr.mxu0 0.0
    %924 = vmatpush1.msra.mxu0 0.0
    %925 = vmatprep.subr.mxu0 0.0
    %926 = vmatpush1.msra.mxu0 0.0
    %927 = vmatprep.subr.mxu0 0.0
    %928 = vmatpush1.msra.mxu0 0.0
    %929 = vmatprep.subr.mxu0 0.0
    %930 = vmatpush1.msra.mxu0 0.0
    %931 = vmatprep.subr.mxu0 0.0
    %932 = vmatpush1.msra.mxu0 0.0
    %933 = vmatprep.subr.mxu0 0.0
    %934 = vmatpush1.msra.mxu0 0.0
    %935 = vmatprep.subr.mxu0 0.0
    %936 = vmatpush1.msra.mxu0 0.0
    %937 = vmatprep.subr.mxu0 0.0
    %938 = vmatpush1.msra.mxu0 0.0
    %939 = vmatprep.subr.mxu0 0.0
    %940 = vmatpush1.msra.mxu0 0.0
    %941 = vmatprep.subr.mxu0 0.0
    %942 = vmatpush1.msra.mxu0 0.0
    %943 = vmatprep.subr.mxu0 0.0
    %944 = vmatpush1.msra.mxu0 0.0
    %945 = vmatprep.subr.mxu0 0.0
    %946 = vmatpush1.msra.mxu0 0.0
    %947 = vmatprep.subr.mxu0 0.0
    %948 = vmatpush1.msra.mxu0 0.0
    %949 = vmatprep.subr.mxu0 0.0
    %950 = vmatpush1.msra.mxu0 0.0
    %951 = vmatprep.subr.mxu0 0.0
    %952 = vmatpush1.msra.mxu0 0.0
    %953 = vmatprep.subr.mxu0 0.0
    %954 = vmatpush1.msra.mxu0 0.0
    %955 = vmatprep.subr.mxu0 0.0
    %956 = vmatpush1.msra.mxu0 0.0
    %957 = vmatprep.subr.mxu0 0.0
    %958 = vmatpush1.msra.mxu0 0.0
    %959 = vmatprep.subr.mxu0 0.0
    %960 = vmatpush1.msra.mxu0 0.0
    %961 = vmatprep.subr.mxu0 0.0
    %962 = vmatpush1.msra.mxu0 0.0
    %963 = vmatprep.subr.mxu0 0.0
    %964 = vmatpush1.msra.mxu0 0.0
    %965 = vmatprep.subr.mxu0 0.0
    %966 = vmatpush1.msra.mxu0 0.0
    %967 = vmatprep.subr.mxu0 0.0
    %968 = vmatpush1.msra.mxu0 0.0
    %969 = vmatprep.subr.mxu0 0.0
    %970 = vmatpush1.msra.mxu0 0.0
    %971 = vmatprep.mubr.f32.mxu0 0.0
    %972 = vmatmul.mubr.f32.gmra.mrb[0].mxu0 %v902
    %v973 = vpop.f32.mrb[0].mxu0
    %v974 = vadd.f32 %v879, %v973
    %v975 = vpop.f32.mrb[0].mxu0
    %976 = vmatprep.mubr.f32.mxu0 0.0
    %977 = vmatmul.mubr.f32.gmra.mrb[0].mxu0 %v905
    %v978 = vpop.f32.mrb[0].mxu0
    %v979 = vadd.f32 %v883, %v978
    %v980 = vpop.f32.mrb[0].mxu0
    %981 = vdwg.mxu0
    %986 = vrot.lane.b32.xlu0 %v873, 97
    %v987 = vpop.permute.xlu0 %986
    %988 = vrot.lane.b32.xlu0 %v874, 97
    %v989 = vpop.permute.xlu0 %988
    %990 = vrot.lane.b32.xlu0 %v875, 97
    %v991 = vpop.permute.xlu0 %990
    %992 = vrot.lane.b32.xlu0 %v876, 97
    %v993 = vpop.permute.xlu0 %992
    %998 = vmatprep.subr.mxu0 0.0
    %999 = vmatpush1.msra.mxu0 %v987
    %1000 = vmatprep.subr.mxu0 0.0
    %1001 = vmatpush1.msra.mxu0 %v989
    %1002 = vmatprep.subr.mxu0 0.0
    %1003 = vmatpush1.msra.mxu0 %v991
    %1004 = vmatprep.subr.mxu0 0.0
    %1005 = vmatpush1.msra.mxu0 %v993
    %1006 = vmatprep.subr.mxu0 0.0
    %1007 = vmatpush1.msra.mxu0 0.0
    %1008 = vmatprep.subr.mxu0 0.0
    %1009 = vmatpush1.msra.mxu0 0.0
    %1010 = vmatprep.subr.mxu0 0.0
    %1011 = vmatpush1.msra.mxu0 0.0
    %1012 = vmatprep.subr.mxu0 0.0
    %1013 = vmatpush1.msra.mxu0 0.0
    %1014 = vmatprep.subr.mxu0 0.0
    %1015 = vmatpush1.msra.mxu0 0.0
    %1016 = vmatprep.subr.mxu0 0.0
    %1017 = vmatpush1.msra.mxu0 0.0
    %1018 = vmatprep.subr.mxu0 0.0
    %1019 = vmatpush1.msra.mxu0 0.0
    %1020 = vmatprep.subr.mxu0 0.0
    %1021 = vmatpush1.msra.mxu0 0.0
    %1022 = vmatprep.subr.mxu0 0.0
    %1023 = vmatpush1.msra.mxu0 0.0
    %1024 = vmatprep.subr.mxu0 0.0
    %1025 = vmatpush1.msra.mxu0 0.0
    %1026 = vmatprep.subr.mxu0 0.0
    %1027 = vmatpush1.msra.mxu0 0.0
    %1028 = vmatprep.subr.mxu0 0.0
    %1029 = vmatpush1.msra.mxu0 0.0
    %1030 = vmatprep.subr.mxu0 0.0
    %1031 = vmatpush1.msra.mxu0 0.0
    %1032 = vmatprep.subr.mxu0 0.0
    %1033 = vmatpush1.msra.mxu0 0.0
    %1034 = vmatprep.subr.mxu0 0.0
    %1035 = vmatpush1.msra.mxu0 0.0
    %1036 = vmatprep.subr.mxu0 0.0
    %1037 = vmatpush1.msra.mxu0 0.0
    %1038 = vmatprep.subr.mxu0 0.0
    %1039 = vmatpush1.msra.mxu0 0.0
    %1040 = vmatprep.subr.mxu0 0.0
    %1041 = vmatpush1.msra.mxu0 0.0
    %1042 = vmatprep.subr.mxu0 0.0
    %1043 = vmatpush1.msra.mxu0 0.0
    %1044 = vmatprep.subr.mxu0 0.0
    %1045 = vmatpush1.msra.mxu0 0.0
    %1046 = vmatprep.subr.mxu0 0.0
    %1047 = vmatpush1.msra.mxu0 0.0
    %1048 = vmatprep.subr.mxu0 0.0
    %1049 = vmatpush1.msra.mxu0 0.0
    %1050 = vmatprep.subr.mxu0 0.0
    %1051 = vmatpush1.msra.mxu0 0.0
    %1052 = vmatprep.subr.mxu0 0.0
    %1053 = vmatpush1.msra.mxu0 0.0
    %1054 = vmatprep.subr.mxu0 0.0
    %1055 = vmatpush1.msra.mxu0 0.0
    %1056 = vmatprep.subr.mxu0 0.0
    %1057 = vmatpush1.msra.mxu0 0.0
    %1058 = vmatprep.subr.mxu0 0.0
    %1059 = vmatpush1.msra.mxu0 0.0
    %1060 = vmatprep.subr.mxu0 0.0
    %1061 = vmatpush1.msra.mxu0 0.0
    %1062 = vmatprep.mubr.f32.mxu0 0.0
    %1063 = vmatmul.mubr.f32.gmra.mrb[0].mxu0 %v902
    %v1064 = vpop.f32.mrb[0].mxu0
    %v1065 = vadd.f32 %v879, %v1064
    %v1066 = vpop.f32.mrb[0].mxu0
    %1067 = vmatprep.mubr.f32.mxu0 0.0
    %1068 = vmatmul.mubr.f32.gmra.mrb[0].mxu0 %v905
    %v1069 = vpop.f32.mrb[0].mxu0
    %v1070 = vadd.f32 %v883, %v1069
    %v1071 = vpop.f32.mrb[0].mxu0
    %1072 = vdwg.mxu0
    %v1073 = vadd.f32 %v974, %v32
    %v1074 = vadd.f32 %v979, %v33
    %v1075 = vadd.f32 %v1065, %v34
    %v1076 = vadd.f32 %v1070, %v35
    %1077 = vst.msk [vmem:[#allocation5] sm:$0xff] %vm585, %v1073
    %1078 = vst.msk [vmem:[#allocation5 + $0x8] sm:$0xff] %vm585, %v1074
    %1079 = vst.msk [vmem:[#allocation5 + $0x10] sm:$0xff] %vm585, %v1075
    %1080 = vst.msk [vmem:[#allocation5 + $0x18] sm:$0xff] %vm585, %v1076
    // Predicated region
    $region22: #{inverted_residual_se.1} parent=1 // pred_check
      _
    $region23: #{inverted_residual_se.1} parent=1 // pred_check_branch
      %1082 = sbr.rel (0) target = $region25
    $region24: #{inverted_residual_se.1} parent=1 // pred_region
      %s1084 = ssub.s32 512, 512
      %1085 = vsyncadd [#allocation4], %s1084
      %s1086 = sshll.u32 [#allocation5], 4
      %s1087 = int_to_ptr.vmem [resolvable:$true] %s1086
      %1092 = dma.vmem_to_hbm [thread:$0]  %s1087, 512, %s4, [#allocation4], 128, 128, 8
    $region25: #{inverted_residual_se.1} parent=1 // pred_fallthru
      _
    // Predicated region
    $region26: #{inverted_residual_se.1} parent=1 // pred_check
      _
    $region27: #{inverted_residual_se.1} parent=1 // pred_check_branch
      %1094 = sbr.rel (0) target = $region29
    $region28: #{inverted_residual_se.1} parent=1 // pred_region
      %1095 = dma.done [#allocation4], 512
    $region29: #{inverted_residual_se.1} parent=1 // pred_fallthru
      _
    %1096 = vsyncpa [#allocation3], 1
    %1097 = vsyncpa [#allocation4], 1

</llo_original>
